<compile_context>
chip_gen: v5e
topology: v5e:2x2
jax: 0.10.0
libtpu: 0.0.40
codegen_flags: <defaults>
</compile_context>

<pallas_src>
import math

import jax
import jax.numpy as jnp
from jax.experimental import pallas as pl
from jax.experimental.pallas import tpu as pltpu


def _round_up(n, m):
    return ((n + m - 1) // m) * m


_ACTS = {
    "relu": lambda z: jnp.maximum(z, 0.0),
    "tanh": jnp.tanh,
    "sigmoid": jax.nn.sigmoid,
}

_LANE = 128        # feature dims padded to multiples of this (lane-dense MXU/stores)
_SUBLANE = 8       # batch tiles padded to multiples of this
_MAX_TILE_B = 512  # batch tile cap (128 was ~3x below HBM roofline per tile sweeps)
# Above this resident-weight footprint, stop double-buffering the
# constant-index weight/bias blocks (v7x has only 64 MiB VMEM per TC).
_SINGLE_BUFFER_WEIGHT_BYTES = 8 << 20


# ----------------------------------------------------------------------------
# Fused MLP kernel: chains all layers on the VMEM batch tile.
# ----------------------------------------------------------------------------
def _make_fused_mlp_kernel(num_hidden, act_name, individual_grads, dims_pad):
    act = _ACTS[act_name]
    num_layers = num_hidden + 1

    def kernel(*refs):
        # refs: x_ref (f32),
        #       w_1 .. w_L           (bf16, pre-transposed, 128-padded),
        #       bias_ref             (f32, (num_layers, d_max_pad)),
        #       z_out_ref, [Z_1 .. Z_H]   (if individual_grads)
        x_ref = refs[0]
        w_refs = refs[1:1 + num_layers]
        bias_ref = refs[1 + num_layers]
        o_refs = refs[2 + num_layers:]

        h = x_ref[...]                                    # (TILE_B, in_pad) f32
        for l in range(num_hidden):
            d_out = dims_pad[l + 1]
            # bf16 MXU operands, f32 accumulation; bias + activation in f32.
            z = jnp.dot(h.astype(jnp.bfloat16), w_refs[l][...],
                        preferred_element_type=jnp.float32)
            z = z + bias_ref[l:l + 1, :d_out]
            h = act(z)
            if individual_grads:
                o_refs[1 + l][...] = z                    # Z_l (pre-activation)
        d_out = dims_pad[-1]
        z_out = jnp.dot(h.astype(jnp.bfloat16), w_refs[num_hidden][...],
                        preferred_element_type=jnp.float32)
        o_refs[0][...] = z_out + bias_ref[num_hidden:num_hidden + 1, :d_out]

    return kernel


def _fused_mlp_call(x_pad, wts_bf16, bias_pack, dims_pad, act_name,
                    individual_grads, tile_b):
    """x_pad: (B_pad, in_pad) f32; wts_bf16[l]: (d_l_pad, d_{l+1}_pad) bf16;
    bias_pack: (num_layers, d_max_pad) f32; dims_pad multiples of 128."""
    B_pad, in_pad = x_pad.shape
    num_layers = len(wts_bf16)
    num_hidden = num_layers - 1
    out_pad = dims_pad[-1]
    grid = (B_pad // tile_b,)

    # ---- VMEM budget (drives buffer counts + vmem_limit_bytes) ----
    weight_bytes = sum(int(w.size) * 2 for w in wts_bf16)          # bf16
    bias_bytes = int(bias_pack.size) * 4
    single_buffer_weights = (
        2 * (weight_bytes + bias_bytes) > _SINGLE_BUFFER_WEIGHT_BYTES)
    w_bufs = 1 if single_buffer_weights else 2

    x_tile_bytes = tile_b * in_pad * 4
    out_dims = [out_pad] + ([dims_pad[l + 1] for l in range(num_hidden)]
                            if individual_grads else [])
    out_tile_bytes = sum(tile_b * d * 4 for d in out_dims)
    interm_bytes = 2 * sum(tile_b * d * 4 for d in dims_pad)       # h/z chain headroom
    needed = (2 * x_tile_bytes + w_bufs * (weight_bytes + bias_bytes)
              + 2 * out_tile_bytes + interm_bytes)
    vmem_limit = int(min(64 << 20, max(32 << 20, needed + (4 << 20))))

    # Constant-index (resident) weight/bias blocks.  When the model is large,
    # single-buffer them: the block index never advances, so double-buffering
    # is pure VMEM waste (matters on v7x's 64 MiB/TC, v5e's 16 MiB scoped).
    def _resident_spec(shape):
        if single_buffer_weights:
            return pl.BlockSpec(shape, lambda i: (0, 0),
                                pipeline_mode=pl.Buffered(1))
        return pl.BlockSpec(shape, lambda i: (0, 0))

    in_specs = [pl.BlockSpec((tile_b, in_pad), lambda i: (i, 0))]
    in_specs += [_resident_spec(w.shape) for w in wts_bf16]
    in_specs.append(_resident_spec(bias_pack.shape))

    out_shapes = [jax.ShapeDtypeStruct((B_pad, out_pad), jnp.float32)]
    out_specs = [pl.BlockSpec((tile_b, out_pad), lambda i: (i, 0))]
    if individual_grads:
        for l in range(num_hidden):
            d = dims_pad[l + 1]
            out_shapes.append(jax.ShapeDtypeStruct((B_pad, d), jnp.float32))
            out_specs.append(pl.BlockSpec((tile_b, d), lambda i: (i, 0)))

    flops = 2 * B_pad * sum(dims_pad[l] * dims_pad[l + 1]
                            for l in range(num_layers))
    transcendentals = (B_pad * sum(dims_pad[1:-1])
                       if act_name in ("tanh", "sigmoid") else 0)
    bytes_accessed = int(4 * x_pad.size + weight_bytes + bias_bytes
                         + 4 * sum(int(math.prod(s.shape)) for s in out_shapes))

    outs = pl.pallas_call(
        _make_fused_mlp_kernel(num_hidden, act_name, individual_grads,
                               dims_pad),
        grid_spec=pltpu.PrefetchScalarGridSpec(
            num_scalar_prefetch=0,
            grid=grid,
            in_specs=in_specs,
            out_specs=tuple(out_specs),
        ),
        out_shape=tuple(out_shapes),
        compiler_params=pltpu.CompilerParams(
            dimension_semantics=("parallel",),     # shard batch across TCs (v7x)
            vmem_limit_bytes=vmem_limit),
        cost_estimate=pl.CostEstimate(
            flops=flops,
            transcendentals=transcendentals,
            bytes_accessed=bytes_accessed),
    )(x_pad, *wts_bf16, bias_pack)
    return outs


# ----------------------------------------------------------------------------
# IndividualGradientMLP (forward only) in JAX + Pallas
# ----------------------------------------------------------------------------
class IndividualGradientMLP:
    def __init__(self, input_size, hidden_sizes, output_size, act_func="relu",
                 key=None):
        self.input_size = input_size
        self.hidden_sizes = list(hidden_sizes)
        if output_size is not None:
            self.output_size = output_size
            self.squeeze_output = False
        else:
            self.output_size = 1
            self.squeeze_output = True
        assert act_func in ("relu", "tanh", "sigmoid")
        self.act_func = act_func

        if key is None:
            key = jax.random.PRNGKey(0)

        # Parameter init mimicking nn.Linear's default
        # (uniform in [-1/sqrt(fan_in), 1/sqrt(fan_in)]).
        def init_linear(k, fan_in, fan_out):
            kw, kb = jax.random.split(k)
            bound = 1.0 / math.sqrt(fan_in)
            w = jax.random.uniform(kw, (fan_out, fan_in), jnp.float32,
                                   minval=-bound, maxval=bound)
            b = jax.random.uniform(kb, (fan_out,), jnp.float32,
                                   minval=-bound, maxval=bound)
            return w, b

        self.hidden_params = []
        in_sizes = [self.input_size] + self.hidden_sizes[:-1]
        for in_size, out_size in zip(in_sizes, self.hidden_sizes):
            key, sub = jax.random.split(key)
            self.hidden_params.append(init_linear(sub, in_size, out_size))
        last_in = self.hidden_sizes[-1] if self.hidden_sizes else self.input_size
        key, sub = jax.random.split(key)
        self.output_params = init_linear(sub, last_in, self.output_size)

        # ---- One-time layout prep for the fused kernel ----
        # Pre-transpose weights to (in, out), zero-pad every feature dim to a
        # multiple of 128 (lane-dense MXU feed / unmasked stores) and cast to
        # bf16 (MXU-native on v6e/v7x, halves weight residency + DMA bytes).
        # Biases are packed into one (num_layers, d_max_pad) f32 array.
        #
        # PADDING INVARIANT: padded contraction ROWS of every weight must stay
        # exactly zero, and padded bias lanes must stay zero.  That — not
        # act(0)==0 — is what makes padded hidden lanes (sigmoid(0)=0.5!)
        # numerically inert in the next layer.  Keep it that way.
        dims = [self.input_size] + self.hidden_sizes + [self.output_size]
        self._dims = dims
        self._dims_pad = [_round_up(d, _LANE) for d in dims]
        num_layers = len(dims) - 1
        d_max = max(self._dims_pad[1:])

        all_params = self.hidden_params + [self.output_params]
        wts = []
        bias_pack = jnp.zeros((num_layers, d_max), jnp.float32)
        for l, (w, b) in enumerate(all_params):
            d_in, d_out = dims[l], dims[l + 1]
            d_in_p, d_out_p = self._dims_pad[l], self._dims_pad[l + 1]
            wt = jnp.zeros((d_in_p, d_out_p), jnp.float32)
            wt = wt.at[:d_in, :d_out].set(jnp.transpose(w))
            wts.append(wt.astype(jnp.bfloat16))        # padded rows stay exactly 0
            bias_pack = bias_pack.at[l, :d_out].set(b)
        self._wts_bf16 = wts
        self._bias_pack = bias_pack

    @staticmethod
    def _choose_tile_b(B):
        B = max(B, 1)
        tile = min(_MAX_TILE_B, _round_up(B, _SUBLANE))
        # Keep >= 2 grid steps when the batch allows it so the "parallel"
        # batch axis can actually shard across v7x's 2 TensorCores.
        if B > _SUBLANE:
            tile = min(tile, max(_SUBLANE, _round_up((B + 1) // 2, _SUBLANE)))
        return tile

    def forward(self, x, individual_grads=False):
        x_flat = jnp.reshape(x, (-1, self.input_size)).astype(jnp.float32)
        B = x_flat.shape[0]
        in_pad = self._dims_pad[0]

        tile_b = self._choose_tile_b(B)
        B_pad = _round_up(max(B, 1), tile_b)
        x_pad = jnp.zeros((B_pad, in_pad), jnp.float32)
        x_pad = x_pad.at[:B, :self.input_size].set(x_flat)

        outs = _fused_mlp_call(x_pad, self._wts_bf16, self._bias_pack,
                               self._dims_pad, self.act_func,
                               individual_grads, tile_b)

        z = outs[0][:B, :self.output_size]
        if self.squeeze_output:
            z = jnp.reshape(jnp.squeeze(z), (-1,))

        if individual_grads:
            act = _ACTS[self.act_func]
            H_list = [x_flat]
            Z_list = []
            for l, d in enumerate(self.hidden_sizes):
                Z_l = outs[1 + l][:B, :d]
                Z_list.append(Z_l)
                # H_l = act(Z_l) recomputed here (trivial VPU/XLA op) instead
                # of being stored by the kernel: halves the kernel's HBM
                # writeback on the individual_grads path.
                H_list.append(act(Z_l))
            Z_list.append(z)
            # TODO(synk): Z.retain_grad()/requires_grad_ have no JAX equivalent;
            # individual gradients are obtained via jax.vjp/jax.grad instead.
            return z, H_list, Z_list
        return z

    def __call__(self, x, individual_grads=False):
        return self.forward(x, individual_grads)


# ----------------------------------------------------------------------------
# Pure-JAX f32 reference for correctness checking
# ----------------------------------------------------------------------------
def _reference_forward(model, x, individual=False):
    act = _ACTS[model.act_func]
    out = jnp.reshape(x, (-1, model.input_size)).astype(jnp.float32)
    H = [out]
    Zs = []
    for (w, b) in model.hidden_params:
        Z = out @ w.T + b
        out = act(Z)
        H.append(out)
        Zs.append(Z)
    w_o, b_o = model.output_params
    z = out @ w_o.T + b_o
    if model.squeeze_output:
        z = jnp.reshape(jnp.squeeze(z), (-1,))
    Zs.append(z)
    if individual:
        return z, H, Zs
    return z


if __name__ == "__main__":
    key = jax.random.PRNGKey(0)
    kx, kp = jax.random.split(key)

    # x of shape (2, 4, 8) flattened to (-1, input_size=32) -> batch of 2 rows.
    input_size = 32
    hidden_sizes = [64, 32]
    output_size = 8
    x = jax.random.normal(kx, (2, 4, 8), dtype=jnp.float32)

    model = IndividualGradientMLP(input_size, hidden_sizes, output_size,
                                  act_func="relu", key=kp)

    # Plain forward.
    z = model(x)
    z = jax.block_until_ready(z)

    # individual_grads path: single fused kernel emits z and every Z_l;
    # H_l is recomputed in the wrapper.
    z2, H_list, Z_list = model(x, individual_grads=True)
    jax.block_until_ready(z2)
    jax.block_until_ready(H_list)
    jax.block_until_ready(Z_list)

    # Correctness vs. pure-f32 reference.  Tolerance is relaxed (2e-2) because
    # the kernel feeds the MXU with bf16 operands (f32 accumulation).
    TOL = 2e-2
    z_ref, H_ref, Z_ref = _reference_forward(model, x, individual=True)
    assert z.shape == (2, output_size)
    assert jnp.allclose(z, z_ref, atol=TOL, rtol=TOL)
    assert jnp.allclose(z2, z_ref, atol=TOL, rtol=TOL)
    assert len(H_list) == len(hidden_sizes) + 1
    assert len(Z_list) == len(hidden_sizes) + 1
    for h_k, h_r in zip(H_list, H_ref):
        assert h_k.shape == h_r.shape
        assert jnp.allclose(h_k, h_r, atol=TOL, rtol=TOL)
    for z_k, z_r in zip(Z_list, Z_ref):
        assert z_k.shape == z_r.shape
        assert jnp.allclose(z_k, z_r, atol=TOL, rtol=TOL)

    print("KERNEL_OK")
</pallas_src>

<mosaic_0001>
module attributes {stable_mosaic.version = 11 : i64} {
  func.func @kernel(%arg0: i32, %arg1: memref<8x128xf32, #tpu.memory_space<vmem>>, %arg2: memref<128x128xbf16, #tpu.memory_space<vmem>>, %arg3: memref<128x128xbf16, #tpu.memory_space<vmem>>, %arg4: memref<128x128xbf16, #tpu.memory_space<vmem>>, %arg5: memref<3x128xf32, #tpu.memory_space<vmem>>, %arg6: memref<8x128xf32, #tpu.memory_space<vmem>>) attributes {dimension_semantics = [#tpu.dimension_semantics<parallel>], iteration_bounds = array<i64: 1>, scalar_prefetch = 0 : i64, scratch_operands = 0 : i64, tpu.core_type = #tpu.core_type<tc>, window_params = [{transform_indices = @transform_0, window_bounds = array<i64: 8, 128>}, {pipeline_mode = #tpu.pipeline_mode<synchronous>, transform_indices = @transform_1, window_bounds = array<i64: 128, 128>}, {pipeline_mode = #tpu.pipeline_mode<synchronous>, transform_indices = @transform_2, window_bounds = array<i64: 128, 128>}, {pipeline_mode = #tpu.pipeline_mode<synchronous>, transform_indices = @transform_3, window_bounds = array<i64: 128, 128>}, {pipeline_mode = #tpu.pipeline_mode<synchronous>, transform_indices = @transform_4, window_bounds = array<i64: 3, 128>}, {transform_indices = @transform_5, window_bounds = array<i64: 8, 128>}]} {
    %c0 = arith.constant 0 : index
    %c0_0 = arith.constant 0 : index
    %0 = vector.load %arg1[%c0, %c0_0] : memref<8x128xf32, #tpu.memory_space<vmem>>, vector<8x128xf32>
    %1 = arith.truncf %0 : vector<8x128xf32> to vector<8x128xbf16>
    %c0_1 = arith.constant 0 : index
    %c0_2 = arith.constant 0 : index
    %2 = vector.load %arg2[%c0_1, %c0_2] : memref<128x128xbf16, #tpu.memory_space<vmem>>, vector<128x128xbf16>
    %cst = arith.constant dense<0.000000e+00> : vector<8x128xf32>
    %3 = tpu.matmul %1, %2, %cst {dimension_numbers = #tpu.dot_dimension_numbers<[1], [0], [0], [1], [0, 0, 1, 1], [], []>} : vector<8x128xbf16>, vector<128x128xbf16>, vector<8x128xf32> -> vector<8x128xf32>
    %c0_3 = arith.constant 0 : index
    %c0_4 = arith.constant 0 : index
    %4 = vector.load %arg5[%c0_3, %c0_4] : memref<3x128xf32, #tpu.memory_space<vmem>>, vector<1x128xf32>
    %5 = vector.broadcast %4 : vector<1x128xf32> to vector<8x128xf32>
    %6 = arith.addf %3, %5 : vector<8x128xf32>
    %cst_5 = arith.constant 0.000000e+00 : f32
    %7 = vector.broadcast %cst_5 : f32 to vector<8x128xf32>
    %8 = arith.maximumf %6, %7 : vector<8x128xf32>
    %9 = arith.truncf %8 : vector<8x128xf32> to vector<8x128xbf16>
    %c0_6 = arith.constant 0 : index
    %c0_7 = arith.constant 0 : index
    %10 = vector.load %arg3[%c0_6, %c0_7] : memref<128x128xbf16, #tpu.memory_space<vmem>>, vector<128x128xbf16>
    %cst_8 = arith.constant dense<0.000000e+00> : vector<8x128xf32>
    %11 = tpu.matmul %9, %10, %cst_8 {dimension_numbers = #tpu.dot_dimension_numbers<[1], [0], [0], [1], [0, 0, 1, 1], [], []>} : vector<8x128xbf16>, vector<128x128xbf16>, vector<8x128xf32> -> vector<8x128xf32>
    %c1 = arith.constant 1 : index
    %c0_9 = arith.constant 0 : index
    %12 = vector.load %arg5[%c1, %c0_9] : memref<3x128xf32, #tpu.memory_space<vmem>>, vector<1x128xf32>
    %13 = vector.broadcast %12 : vector<1x128xf32> to vector<8x128xf32>
    %14 = arith.addf %11, %13 : vector<8x128xf32>
    %cst_10 = arith.constant 0.000000e+00 : f32
    %15 = vector.broadcast %cst_10 : f32 to vector<8x128xf32>
    %16 = arith.maximumf %14, %15 : vector<8x128xf32>
    %17 = arith.truncf %16 : vector<8x128xf32> to vector<8x128xbf16>
    %c0_11 = arith.constant 0 : index
    %c0_12 = arith.constant 0 : index
    %18 = vector.load %arg4[%c0_11, %c0_12] : memref<128x128xbf16, #tpu.memory_space<vmem>>, vector<128x128xbf16>
    %cst_13 = arith.constant dense<0.000000e+00> : vector<8x128xf32>
    %19 = tpu.matmul %17, %18, %cst_13 {dimension_numbers = #tpu.dot_dimension_numbers<[1], [0], [0], [1], [0, 0, 1, 1], [], []>} : vector<8x128xbf16>, vector<128x128xbf16>, vector<8x128xf32> -> vector<8x128xf32>
    %c2 = arith.constant 2 : index
    %c0_14 = arith.constant 0 : index
    %20 = vector.load %arg5[%c2, %c0_14] : memref<3x128xf32, #tpu.memory_space<vmem>>, vector<1x128xf32>
    %21 = vector.broadcast %20 : vector<1x128xf32> to vector<8x128xf32>
    %22 = arith.addf %19, %21 : vector<8x128xf32>
    %c0_15 = arith.constant 0 : index
    %c0_16 = arith.constant 0 : index
    %23 = vector.load %arg6[%c0_15, %c0_16] : memref<8x128xf32, #tpu.memory_space<vmem>>, vector<8x128xf32>
    tpu.vector_store %arg6[%c0_15, %c0_16], %22 {strides = array<i32>} : memref<8x128xf32, #tpu.memory_space<vmem>>, vector<8x128xf32>,
    return
  }
  func.func @transform_0(%arg0: i32) -> (i32, i32) {
    %c0_i32 = arith.constant 0 : i32
    %c0_i32_0 = arith.constant 0 : i32
    return %arg0, %c0_i32 : i32, i32
  }
  func.func @transform_1(%arg0: i32) -> (i32, i32) {
    %c0_i32 = arith.constant 0 : i32
    %c0_i32_0 = arith.constant 0 : i32
    %c0_i32_1 = arith.constant 0 : i32
    return %c0_i32, %c0_i32_0 : i32, i32
  }
  func.func @transform_2(%arg0: i32) -> (i32, i32) {
    %c0_i32 = arith.constant 0 : i32
    %c0_i32_0 = arith.constant 0 : i32
    %c0_i32_1 = arith.constant 0 : i32
    return %c0_i32, %c0_i32_0 : i32, i32
  }
  func.func @transform_3(%arg0: i32) -> (i32, i32) {
    %c0_i32 = arith.constant 0 : i32
    %c0_i32_0 = arith.constant 0 : i32
    %c0_i32_1 = arith.constant 0 : i32
    return %c0_i32, %c0_i32_0 : i32, i32
  }
  func.func @transform_4(%arg0: i32) -> (i32, i32) {
    %c0_i32 = arith.constant 0 : i32
    %c0_i32_0 = arith.constant 0 : i32
    %c0_i32_1 = arith.constant 0 : i32
    return %c0_i32, %c0_i32_0 : i32, i32
  }
  func.func @transform_5(%arg0: i32) -> (i32, i32) {
    %c0_i32 = arith.constant 0 : i32
    %c0_i32_0 = arith.constant 0 : i32
    return %arg0, %c0_i32 : i32, i32
  }
}

</mosaic_0001>

<llo_original>
// kernel: tpu_custom_call.1
$region0: #{tpu_custom_call.1}
  #allocation0 [shape = 'u32[]', space=smem, size = 0x4, offset = 0x4, fixed_abs, tag = 'smem constant byte address 0x4 - core index']
  #allocation1 [shape = 'u32[72,128]{1,0:T(1,128)}', space=vmem, size = 0x9000, scoped, tag = 'internal scratch']
  %s0 = inlined_call_operand.hbm [shape: f32[8,128], index: 0, kind: input, shape index: {}]
  %s1 = inlined_call_operand.hbm [shape: bf16[128,128], index: 1, kind: input, shape index: {}]
  %s2 = inlined_call_operand.hbm [shape: bf16[128,128], index: 2, kind: input, shape index: {}]
  %s3 = inlined_call_operand.hbm [shape: bf16[128,128], index: 3, kind: input, shape index: {}]
  %s4 = inlined_call_operand.hbm [shape: f32[3,128], index: 4, kind: input, shape index: {}]
  %s5 = inlined_call_operand.hbm [shape: f32[8,128], index: 5, kind: output, shape index: {}]
  %s6 = sld [smem:[#allocation0]]
  $region50: #{tpu_custom_call.1} parent=0
    _
  %s8 = ssub.s32 1, %s6
  %s9 = scalar_select 0, %s8, %s6
  $region1: #{tpu_custom_call.1} parent=0
    #allocation2 [shape = 'u8[4096]{0}', space=vmem, size = 0x1000, scoped, tag = 'input window, operand 0, single buffered']
    #allocation3 [shape = 's32[1]{0}', space=sflag, size = 0x4, scoped, tag = 'scoped memory for tpu_custom_call.1']
    #allocation4 [shape = 's32[1]{0}', space=sflag, size = 0x4, scoped, tag = 'scoped memory for tpu_custom_call.1']
    #allocation5 [shape = 'u8[32768]{0}', space=vmem, size = 0x8000, scoped, tag = 'input window, operand 1, single buffered']
    #allocation6 [shape = 's32[1]{0}', space=sflag, size = 0x4, scoped, tag = 'scoped memory for tpu_custom_call.1']
    #allocation7 [shape = 'u8[32768]{0}', space=vmem, size = 0x8000, scoped, tag = 'input window, operand 2, single buffered']
    #allocation8 [shape = 'u8[32768]{0}', space=vmem, size = 0x8000, scoped, tag = 'input window, operand 3, single buffered']
    #allocation9 [shape = 's32[1]{0}', space=sflag, size = 0x4, scoped, tag = 'scoped memory for tpu_custom_call.1']
    #allocation10 [shape = 'u8[2048]{0}', space=vmem, size = 0x800, scoped, tag = 'input window, operand 4, single buffered']
    #allocation11 [shape = 'u8[4096]{0}', space=vmem, size = 0x1000, scoped, tag = 'output window, operand 0, single buffered']
    %10 = vsyncpa [#allocation3], 0
    %11 = vsyncpa [#allocation6], 0
    %12 = vsyncpa [#allocation9], 0
    %13 = vsyncpa [#allocation4], 0
    // Predicated region
    $region2: #{tpu_custom_call.1} parent=1 // pred_check
      _
    $region3: #{tpu_custom_call.1} parent=1 // pred_check_branch
      %15 = sbr.rel (0) target = $region5
    $region4: #{tpu_custom_call.1} parent=1 // pred_region
      %17 = vsyncadd [#allocation3], 0
      %s19 = sshll.u32 %s0, 4
      %s20 = int_to_ptr.hbm [resolvable:$true] %s19
      %s21 = sshll.u32 [#allocation2], 4
      %s22 = int_to_ptr.vmem [resolvable:$true] %s21
      %24 = dma.hbm_to_vmem [thread:$0]  %s20, 128, %s22, [#allocation3]
    $region5: #{tpu_custom_call.1} parent=1 // pred_fallthru
      _
    // Predicated region
    $region6: #{tpu_custom_call.1} parent=1 // pred_check
      _
    $region7: #{tpu_custom_call.1} parent=1 // pred_check_branch
      %26 = sbr.rel (0) target = $region9
    $region8: #{tpu_custom_call.1} parent=1 // pred_region
      %28 = vsyncadd [#allocation6], 0
      %s29 = sshll.u32 %s1, 4
      %s30 = int_to_ptr.hbm [resolvable:$true] %s29
      %s31 = sshll.u32 [#allocation5], 4
      %s32 = int_to_ptr.vmem [resolvable:$true] %s31
      %37 = dma.hbm_to_vmem [thread:$0]  %s30, 1024, %s32, [#allocation6], 64, 64, 4
    $region9: #{tpu_custom_call.1} parent=1 // pred_fallthru
      _
    // Predicated region
    $region10: #{tpu_custom_call.1} parent=1 // pred_check
      _
    $region11: #{tpu_custom_call.1} parent=1 // pred_check_branch
      %39 = sbr.rel (0) target = $region13
    $region12: #{tpu_custom_call.1} parent=1 // pred_region
      %41 = vsyncadd [#allocation6], 0
      %s42 = sshll.u32 %s2, 4
      %s43 = int_to_ptr.hbm [resolvable:$true] %s42
      %s44 = sshll.u32 [#allocation7], 4
      %s45 = int_to_ptr.vmem [resolvable:$true] %s44
      %50 = dma.hbm_to_vmem [thread:$0]  %s43, 1024, %s45, [#allocation6], 64, 64, 4
    $region13: #{tpu_custom_call.1} parent=1 // pred_fallthru
      _
    // Predicated region
    $region14: #{tpu_custom_call.1} parent=1 // pred_check
      _
    $region15: #{tpu_custom_call.1} parent=1 // pred_check_branch
      %52 = sbr.rel (0) target = $region17
    $region16: #{tpu_custom_call.1} parent=1 // pred_region
      %54 = vsyncadd [#allocation9], 0
      %s55 = sshll.u32 %s3, 4
      %s56 = int_to_ptr.hbm [resolvable:$true] %s55
      %s57 = sshll.u32 [#allocation8], 4
      %s58 = int_to_ptr.vmem [resolvable:$true] %s57
      %63 = dma.hbm_to_vmem [thread:$0]  %s56, 1024, %s58, [#allocation9], 64, 64, 4
    $region17: #{tpu_custom_call.1} parent=1 // pred_fallthru
      _
    // Predicated region
    $region18: #{tpu_custom_call.1} parent=1 // pred_check
      _
    $region19: #{tpu_custom_call.1} parent=1 // pred_check_branch
      %65 = sbr.rel (0) target = $region21
    $region20: #{tpu_custom_call.1} parent=1 // pred_region
      %67 = vsyncadd [#allocation9], 0
      %s69 = sshll.u32 %s4, 4
      %s70 = int_to_ptr.hbm [resolvable:$true] %s69
      %s71 = sshll.u32 [#allocation10], 4
      %s72 = int_to_ptr.vmem [resolvable:$true] %s71
      %74 = dma.hbm_to_vmem [thread:$0]  %s70, 64, %s72, [#allocation9]
    $region21: #{tpu_custom_call.1} parent=1 // pred_fallthru
      _
    // Predicated region
    $region22: #{tpu_custom_call.1} parent=1 // pred_check
      _
    $region23: #{tpu_custom_call.1} parent=1 // pred_check_branch
      %76 = sbr.rel (0) target = $region25
    $region24: #{tpu_custom_call.1} parent=1 // pred_region
      %78 = dma.done [#allocation3], 128
    $region25: #{tpu_custom_call.1} parent=1 // pred_fallthru
      _
    // Predicated region
    $region26: #{tpu_custom_call.1} parent=1 // pred_check
      _
    $region27: #{tpu_custom_call.1} parent=1 // pred_check_branch
      %80 = sbr.rel (0) target = $region29
    $region28: #{tpu_custom_call.1} parent=1 // pred_region
      %82 = dma.done [#allocation6], 1024
    $region29: #{tpu_custom_call.1} parent=1 // pred_fallthru
      _
    // Predicated region
    $region30: #{tpu_custom_call.1} parent=1 // pred_check
      _
    $region31: #{tpu_custom_call.1} parent=1 // pred_check_branch
      %84 = sbr.rel (0) target = $region33
    $region32: #{tpu_custom_call.1} parent=1 // pred_region
      %86 = dma.done [#allocation6], 1024
    $region33: #{tpu_custom_call.1} parent=1 // pred_fallthru
      _
    // Predicated region
    $region34: #{tpu_custom_call.1} parent=1 // pred_check
      _
    $region35: #{tpu_custom_call.1} parent=1 // pred_check_branch
      %88 = sbr.rel (0) target = $region37
    $region36: #{tpu_custom_call.1} parent=1 // pred_region
      %90 = dma.done [#allocation9], 1024
    $region37: #{tpu_custom_call.1} parent=1 // pred_fallthru
      _
    // Predicated region
    $region38: #{tpu_custom_call.1} parent=1 // pred_check
      _
    $region39: #{tpu_custom_call.1} parent=1 // pred_check_branch
      %92 = sbr.rel (0) target = $region41
    $region40: #{tpu_custom_call.1} parent=1 // pred_region
      %94 = dma.done [#allocation9], 64
    $region41: #{tpu_custom_call.1} parent=1 // pred_fallthru
      _
    %v95 = vld [vmem:[#allocation2] sm:$0xff]
    %v96 = vpack.c.bf16 %v95, %v95
    %v97 = vld [vmem:[#allocation5] sm:$0xf]
    %v98 = vld [vmem:[#allocation5 + $0x4] sm:$0xf]
    %v99 = vld [vmem:[#allocation5 + $0x8] sm:$0xf]
    %v100 = vld [vmem:[#allocation5 + $0xc] sm:$0xf]
    %v101 = vld [vmem:[#allocation5 + $0x10] sm:$0xf]
    %v102 = vld [vmem:[#allocation5 + $0x14] sm:$0xf]
    %v103 = vld [vmem:[#allocation5 + $0x18] sm:$0xf]
    %v104 = vld [vmem:[#allocation5 + $0x1c] sm:$0xf]
    %v105 = vld [vmem:[#allocation5 + $0x20] sm:$0xf]
    %v106 = vld [vmem:[#allocation5 + $0x24] sm:$0xf]
    %v107 = vld [vmem:[#allocation5 + $0x28] sm:$0xf]
    %v108 = vld [vmem:[#allocation5 + $0x2c] sm:$0xf]
    %v109 = vld [vmem:[#allocation5 + $0x30] sm:$0xf]
    %v110 = vld [vmem:[#allocation5 + $0x34] sm:$0xf]
    %v111 = vld [vmem:[#allocation5 + $0x38] sm:$0xf]
    %v112 = vld [vmem:[#allocation5 + $0x3c] sm:$0xf]
    %v113 = vld [vmem:[#allocation10] sm:$0x1]
    %v114 = vperm.slane %v113, 0
    %v131 = vunpack.c.l.b16 %v97
    %v132 = vunpack.c.l.b16 %v98
    %v133 = vunpack.c.l.b16 %v99
    %v134 = vunpack.c.l.b16 %v100
    %v135 = vunpack.c.l.b16 %v101
    %v136 = vunpack.c.l.b16 %v102
    %v137 = vunpack.c.l.b16 %v103
    %v138 = vunpack.c.l.b16 %v104
    %v139 = vunpack.c.l.b16 %v105
    %v140 = vunpack.c.l.b16 %v106
    %v141 = vunpack.c.l.b16 %v107
    %v142 = vunpack.c.l.b16 %v108
    %v143 = vunpack.c.l.b16 %v109
    %v144 = vunpack.c.l.b16 %v110
    %v145 = vunpack.c.l.b16 %v111
    %v146 = vunpack.c.l.b16 %v112
    %v147 = vpack.c.b16 %v132, %v131
    %v148 = vpack.c.b16 %v134, %v133
    %v149 = vpack.c.b16 %v136, %v135
    %v150 = vpack.c.b16 %v138, %v137
    %v151 = vpack.c.b16 %v140, %v139
    %v152 = vpack.c.b16 %v142, %v141
    %v153 = vpack.c.b16 %v144, %v143
    %v154 = vpack.c.b16 %v146, %v145
    %163 = vmatpush.bf16.msra.mxu0 %v154
    %164 = vmatpush.bf16.msra.mxu0 %v153
    %165 = vmatpush.bf16.msra.mxu0 %v152
    %166 = vmatpush.bf16.msra.mxu0 %v151
    %167 = vmatpush.bf16.msra.mxu0 %v150
    %168 = vmatpush.bf16.msra.mxu0 %v149
    %169 = vmatpush.bf16.msra.mxu0 %v148
    %170 = vmatpush.bf16.msra.mxu0 %v147
    %171 = vmatmul.bf16.gmra.mxu0 %v96
    %v172 = vpop.f32.mrf.mxu0
    %v173 = vadd.f32 %v114, %v172
    %v174 = vpop.f32.mrf.mxu0
    %175 = vdwg.mxu0
    %v176 = vmax.f32 %v173, 0.0
    %v177 = vpack.c.bf16 %v176, %v176
    %v178 = vld [vmem:[#allocation7] sm:$0xf]
    %v179 = vld [vmem:[#allocation7 + $0x4] sm:$0xf]
    %v180 = vld [vmem:[#allocation7 + $0x8] sm:$0xf]
    %v181 = vld [vmem:[#allocation7 + $0xc] sm:$0xf]
    %v182 = vld [vmem:[#allocation7 + $0x10] sm:$0xf]
    %v183 = vld [vmem:[#allocation7 + $0x14] sm:$0xf]
    %v184 = vld [vmem:[#allocation7 + $0x18] sm:$0xf]
    %v185 = vld [vmem:[#allocation7 + $0x1c] sm:$0xf]
    %v186 = vld [vmem:[#allocation7 + $0x20] sm:$0xf]
    %v187 = vld [vmem:[#allocation7 + $0x24] sm:$0xf]
    %v188 = vld [vmem:[#allocation7 + $0x28] sm:$0xf]
    %v189 = vld [vmem:[#allocation7 + $0x2c] sm:$0xf]
    %v190 = vld [vmem:[#allocation7 + $0x30] sm:$0xf]
    %v191 = vld [vmem:[#allocation7 + $0x34] sm:$0xf]
    %v192 = vld [vmem:[#allocation7 + $0x38] sm:$0xf]
    %v193 = vld [vmem:[#allocation7 + $0x3c] sm:$0xf]
    %v194 = vld [vmem:[#allocation10 + $0x1] sm:$0x1]
    %v195 = vperm.slane %v194, 0
    %v212 = vunpack.c.l.b16 %v178
    %v213 = vunpack.c.l.b16 %v179
    %v214 = vunpack.c.l.b16 %v180
    %v215 = vunpack.c.l.b16 %v181
    %v216 = vunpack.c.l.b16 %v182
    %v217 = vunpack.c.l.b16 %v183
    %v218 = vunpack.c.l.b16 %v184
    %v219 = vunpack.c.l.b16 %v185
    %v220 = vunpack.c.l.b16 %v186
    %v221 = vunpack.c.l.b16 %v187
    %v222 = vunpack.c.l.b16 %v188
    %v223 = vunpack.c.l.b16 %v189
    %v224 = vunpack.c.l.b16 %v190
    %v225 = vunpack.c.l.b16 %v191
    %v226 = vunpack.c.l.b16 %v192
    %v227 = vunpack.c.l.b16 %v193
    %v228 = vpack.c.b16 %v213, %v212
    %v229 = vpack.c.b16 %v215, %v214
    %v230 = vpack.c.b16 %v217, %v216
    %v231 = vpack.c.b16 %v219, %v218
    %v232 = vpack.c.b16 %v221, %v220
    %v233 = vpack.c.b16 %v223, %v222
    %v234 = vpack.c.b16 %v225, %v224
    %v235 = vpack.c.b16 %v227, %v226
    %244 = vmatpush.bf16.msra.mxu0 %v235
    %245 = vmatpush.bf16.msra.mxu0 %v234
    %246 = vmatpush.bf16.msra.mxu0 %v233
    %247 = vmatpush.bf16.msra.mxu0 %v232
    %248 = vmatpush.bf16.msra.mxu0 %v231
    %249 = vmatpush.bf16.msra.mxu0 %v230
    %250 = vmatpush.bf16.msra.mxu0 %v229
    %251 = vmatpush.bf16.msra.mxu0 %v228
    %252 = vmatmul.bf16.gmra.mxu0 %v177
    %v253 = vpop.f32.mrf.mxu0
    %v254 = vadd.f32 %v195, %v253
    %v255 = vpop.f32.mrf.mxu0
    %256 = vdwg.mxu0
    %v257 = vmax.f32 %v254, 0.0
    %v258 = vpack.c.bf16 %v257, %v257
    %v259 = vld [vmem:[#allocation8] sm:$0xf]
    %v260 = vld [vmem:[#allocation8 + $0x4] sm:$0xf]
    %v261 = vld [vmem:[#allocation8 + $0x8] sm:$0xf]
    %v262 = vld [vmem:[#allocation8 + $0xc] sm:$0xf]
    %v263 = vld [vmem:[#allocation8 + $0x10] sm:$0xf]
    %v264 = vld [vmem:[#allocation8 + $0x14] sm:$0xf]
    %v265 = vld [vmem:[#allocation8 + $0x18] sm:$0xf]
    %v266 = vld [vmem:[#allocation8 + $0x1c] sm:$0xf]
    %v267 = vld [vmem:[#allocation8 + $0x20] sm:$0xf]
    %v268 = vld [vmem:[#allocation8 + $0x24] sm:$0xf]
    %v269 = vld [vmem:[#allocation8 + $0x28] sm:$0xf]
    %v270 = vld [vmem:[#allocation8 + $0x2c] sm:$0xf]
    %v271 = vld [vmem:[#allocation8 + $0x30] sm:$0xf]
    %v272 = vld [vmem:[#allocation8 + $0x34] sm:$0xf]
    %v273 = vld [vmem:[#allocation8 + $0x38] sm:$0xf]
    %v274 = vld [vmem:[#allocation8 + $0x3c] sm:$0xf]
    %v275 = vld [vmem:[#allocation10 + $0x2] sm:$0x1]
    %v276 = vperm.slane %v275, 0
    %v293 = vunpack.c.l.b16 %v259
    %v294 = vunpack.c.l.b16 %v260
    %v295 = vunpack.c.l.b16 %v261
    %v296 = vunpack.c.l.b16 %v262
    %v297 = vunpack.c.l.b16 %v263
    %v298 = vunpack.c.l.b16 %v264
    %v299 = vunpack.c.l.b16 %v265
    %v300 = vunpack.c.l.b16 %v266
    %v301 = vunpack.c.l.b16 %v267
    %v302 = vunpack.c.l.b16 %v268
    %v303 = vunpack.c.l.b16 %v269
    %v304 = vunpack.c.l.b16 %v270
    %v305 = vunpack.c.l.b16 %v271
    %v306 = vunpack.c.l.b16 %v272
    %v307 = vunpack.c.l.b16 %v273
    %v308 = vunpack.c.l.b16 %v274
    %v309 = vpack.c.b16 %v294, %v293
    %v310 = vpack.c.b16 %v296, %v295
    %v311 = vpack.c.b16 %v298, %v297
    %v312 = vpack.c.b16 %v300, %v299
    %v313 = vpack.c.b16 %v302, %v301
    %v314 = vpack.c.b16 %v304, %v303
    %v315 = vpack.c.b16 %v306, %v305
    %v316 = vpack.c.b16 %v308, %v307
    %325 = vmatpush.bf16.msra.mxu0 %v316
    %326 = vmatpush.bf16.msra.mxu0 %v315
    %327 = vmatpush.bf16.msra.mxu0 %v314
    %328 = vmatpush.bf16.msra.mxu0 %v313
    %329 = vmatpush.bf16.msra.mxu0 %v312
    %330 = vmatpush.bf16.msra.mxu0 %v311
    %331 = vmatpush.bf16.msra.mxu0 %v310
    %332 = vmatpush.bf16.msra.mxu0 %v309
    %333 = vmatmul.bf16.gmra.mxu0 %v258
    %v334 = vpop.f32.mrf.mxu0
    %v335 = vadd.f32 %v276, %v334
    %v336 = vpop.f32.mrf.mxu0
    %337 = vdwg.mxu0
    %338 = vst [vmem:[#allocation11] sm:$0xff] %v335
    // Predicated region
    $region42: #{tpu_custom_call.1} parent=1 // pred_check
      _
    $region43: #{tpu_custom_call.1} parent=1 // pred_check_branch
      %340 = sbr.rel (0) target = $region45
    $region44: #{tpu_custom_call.1} parent=1 // pred_region
      %342 = vsyncadd [#allocation4], 0
      %s344 = sshll.u32 [#allocation11], 4
      %s345 = int_to_ptr.vmem [resolvable:$true] %s344
      %s346 = sshll.u32 %s5, 4
      %s347 = int_to_ptr.hbm [resolvable:$true] %s346
      %349 = dma.vmem_to_hbm [thread:$0]  %s345, 128, %s347, [#allocation4]
    $region45: #{tpu_custom_call.1} parent=1 // pred_fallthru
      _
    // Predicated region
    $region46: #{tpu_custom_call.1} parent=1 // pred_check
      _
    $region47: #{tpu_custom_call.1} parent=1 // pred_check_branch
      %351 = sbr.rel (0) target = $region49
    $region48: #{tpu_custom_call.1} parent=1 // pred_region
      %353 = dma.done [#allocation4], 128
    $region49: #{tpu_custom_call.1} parent=1 // pred_fallthru
      _
    %354 = vsyncpa [#allocation3], 1
    %355 = vsyncpa [#allocation6], 1
    %356 = vsyncpa [#allocation9], 1
    %357 = vsyncpa [#allocation4], 1

</llo_original>
